<compile_context>
chip_gen: v7x
topology: tpu7x:2x2x1
jax: 0.10.0
libtpu: 0.0.40
codegen_flags: <defaults>
</compile_context>

<pallas_src>
import functools

import jax
import jax.numpy as jnp
from jax.experimental import pallas as pl
from jax.experimental.pallas import tpu as pltpu

LN_EPS = 1e-5


def _patch_embed_kernel(x0_ref, x1_ref, x2_ref, w_ref, bgb_ref, o_ref, acc_ref, *, t_frames):
    """One (row-tile, time-step) block: 3-tap temporal conv as matmuls + bias + LayerNorm.

    x{0,1,2}_ref : (1, TILE_M, K3) bf16  -- patch rows at (clamped) frames 2t-1, 2t, 2t+1
    w_ref        : (3, K3, E)      bf16  -- per-temporal-tap projection matrices (resident)
    bgb_ref      : (3, 1, E)       f32   -- rows: conv bias, LN gamma, LN beta (resident)
    o_ref        : (1, TILE_M, E)
    acc_ref      : (TILE_M, E)     f32 scratch accumulator
    """
    t = pl.program_id(1)

    # Middle tap (frame 2t) is always valid.
    acc_ref[...] = jnp.dot(x1_ref[0], w_ref[1], preferred_element_type=jnp.float32)

    # Leading tap (frame 2t-1): at t == 0 it would be the zero pad -> skip its matmul.
    @pl.when(t > 0)
    def _():
        acc_ref[...] += jnp.dot(x0_ref[0], w_ref[0], preferred_element_type=jnp.float32)

    # Trailing tap (frame 2t+1): when it hits the trailing pad (odd T) -> skip its matmul.
    @pl.when(2 * t + 1 < t_frames)
    def _():
        acc_ref[...] += jnp.dot(x2_ref[0], w_ref[2], preferred_element_type=jnp.float32)

    acc = acc_ref[...] + bgb_ref[0]                       # conv bias, broadcast (1, E)

    # Single-pass LayerNorm statistics over E (lane axis); all f32.
    mean = jnp.mean(acc, axis=-1, keepdims=True)
    msq = jnp.mean(acc * acc, axis=-1, keepdims=True)
    var = msq - mean * mean
    inv = jax.lax.rsqrt(var + LN_EPS)
    o_ref[0] = ((acc - mean) * inv * bgb_ref[1] + bgb_ref[2]).astype(o_ref.dtype)


def _pick_tiling(tile_m, vmem_limit_bytes):
    """Per-generation defaults: big tiles on 128 MiB-VMEM chips, capped on v7x (64 MiB)."""
    if tile_m is not None and vmem_limit_bytes is not None:
        return tile_m, vmem_limit_bytes
    vmem_cap = 64 << 20
    try:
        vmem_cap = int(pltpu.get_tpu_info().vmem_capacity_bytes)
    except Exception:
        pass
    if vmem_cap >= (128 << 20):              # v5e / v6e
        auto_tile, auto_vmem = 2048, 96 << 20
    else:                                    # v7x
        auto_tile, auto_vmem = 1024, 48 << 20
    return (tile_m if tile_m is not None else auto_tile,
            vmem_limit_bytes if vmem_limit_bytes is not None else auto_vmem)


def special_patch_embed(x, conv_w, conv_b, ln_g, ln_b, patch_size, *,
                        tile_m=None, vmem_limit_bytes=None,
                        out_dtype=None, channels_last_out=False):
    """SpeicalPatchEmbed forward.

    x:      (B, C, T, H, W) float32
    conv_w: (E, C, 3, P, P)  -- Conv3d(kernel=(3,P,P), stride=(2,P,P), padding=(1,0,0))
    conv_b, ln_g, ln_b: (E,)
    returns (B, E, T', H', W')   (or (B, T', H', W', E) if channels_last_out)
    """
    B, C, T, H, W = x.shape
    E = conv_w.shape[0]
    P = patch_size
    assert H % P == 0 and W % P == 0, (H, W, P)
    Hp, Wp = H // P, W // P
    Tp = (T + 2 - 3) // 2 + 1            # conv output length along time
    M = B * Hp * Wp                      # rows per output time-step
    K3 = C * P * P                       # contraction size per temporal tap
    out_dtype = out_dtype if out_dtype is not None else x.dtype
    tile_m, vmem_limit_bytes = _pick_tiling(tile_m, vmem_limit_bytes)

    # Spatial patchify relayout (exactly 1x the input; the time pad is NOT materialized and
    # the overlapping 3-frame window is read directly by the kernel's index maps below).
    # bf16 cast up front halves the dominant activation HBM stream.
    xb = x.astype(jnp.bfloat16).reshape(B, C, T, Hp, P, Wp, P)
    x_sp = xb.transpose(2, 0, 3, 5, 1, 4, 6).reshape(T, M, K3)   # rows=(b,hp,wp), K3=(c,kh,kw)

    # Row tiling: cdiv grid + zero-padded tail; tile is a multiple of 16 (bf16 sublanes).
    n_m = pl.cdiv(M, min(tile_m, M))
    tile_m = ((pl.cdiv(M, n_m) + 15) // 16) * 16
    Mp = n_m * tile_m
    if Mp != M:
        x_sp = jnp.pad(x_sp, ((0, 0), (0, Mp - M), (0, 0)))       # padded rows sliced off below

    # Per-tap weights, (kt, c, kh, kw) -> e ; bf16 for the MXU.
    w3 = conv_w.transpose(2, 1, 3, 4, 0).reshape(3, K3, E).astype(jnp.bfloat16)
    # conv bias / LN gamma / LN beta packed into one small resident input.
    bgb = jnp.stack([conv_b, ln_g, ln_b]).reshape(3, 1, E).astype(jnp.float32)

    grid = (n_m, Tp)   # row-tile axis leads so v7x megacore shards rows, not the short time axis
    out = pl.pallas_call(
        functools.partial(_patch_embed_kernel, t_frames=T),
        out_shape=jax.ShapeDtypeStruct((Tp, Mp, E), out_dtype),
        grid_spec=pltpu.PrefetchScalarGridSpec(
            num_scalar_prefetch=0,
            grid=grid,
            in_specs=[
                # three views of the same frame array: clamped frames 2t-1, 2t, 2t+1
                pl.BlockSpec((1, tile_m, K3), lambda m, t: (jnp.maximum(2 * t - 1, 0), m, 0)),
                pl.BlockSpec((1, tile_m, K3), lambda m, t: (2 * t, m, 0)),
                pl.BlockSpec((1, tile_m, K3), lambda m, t: (jnp.minimum(2 * t + 1, T - 1), m, 0)),
                pl.BlockSpec((3, K3, E), lambda m, t: (0, 0, 0)),   # resident weights
                pl.BlockSpec((3, 1, E), lambda m, t: (0, 0, 0)),    # resident bias/gamma/beta
            ],
            out_specs=pl.BlockSpec((1, tile_m, E), lambda m, t: (t, m, 0)),
            scratch_shapes=[pltpu.VMEM((tile_m, E), jnp.float32)],
        ),
        compiler_params=pltpu.CompilerParams(
            dimension_semantics=("parallel", "parallel"),
            vmem_limit_bytes=vmem_limit_bytes,
        ),
    )(x_sp, x_sp, x_sp, w3, bgb)

    out = out[:, :M]                               # drop row padding
    out = out.reshape(Tp, B, Hp, Wp, E)
    if channels_last_out:
        return out.transpose(1, 0, 2, 3, 4)        # (B, T', H', W', E): skips the NCTHW relayout
    return out.transpose(1, 4, 0, 2, 3)            # module-faithful (B, E, T', H', W')


def reference(x, conv_w, conv_b, ln_g, ln_b, P):
    """Pure-JAX reference of the PyTorch forward (for verification)."""
    y = jax.lax.conv_general_dilated(
        x, conv_w,
        window_strides=(2, P, P),
        padding=((1, 1), (0, 0), (0, 0)),
        dimension_numbers=("NCDHW", "OIDHW", "NCDHW"),
    )
    y = y + conv_b[None, :, None, None, None]
    B, E, Tp, Hp, Wp = y.shape
    z = y.reshape(B, E, -1).transpose(0, 2, 1)     # (B, L, E)
    mean = z.mean(-1, keepdims=True)
    var = ((z - mean) ** 2).mean(-1, keepdims=True)
    z = (z - mean) / jnp.sqrt(var + LN_EPS) * ln_g + ln_b
    z = z.reshape(B, Tp, Hp, Wp, E).transpose(0, 4, 1, 2, 3)
    return z


if __name__ == "__main__":
    key = jax.random.PRNGKey(0)
    k1, k2, k3, k4, k5 = jax.random.split(key, 5)

    # Small but lane-aligned config (embed dim multiple of 128, like the real module's 768):
    # B=2, in_chans=3, T=8, img=16, patch=4, embed=128.
    B, C, T, H, W = 2, 3, 8, 16, 16
    P, E = 4, 128

    x = jax.random.normal(k1, (B, C, T, H, W), jnp.float32)
    conv_w = 0.05 * jax.random.normal(k2, (E, C, 3, P, P), jnp.float32)
    conv_b = 0.05 * jax.random.normal(k3, (E,), jnp.float32)
    ln_g = 1.0 + 0.1 * jax.random.normal(k4, (E,), jnp.float32)
    ln_b = 0.1 * jax.random.normal(k5, (E,), jnp.float32)

    ref = reference(x, conv_w, conv_b, ln_g, ln_b, P)

    # 1) Module-faithful output: f32, (B, E, T', H', W').
    fwd = jax.jit(functools.partial(special_patch_embed, patch_size=P))
    out = jax.block_until_ready(fwd(x, conv_w, conv_b, ln_g, ln_b))
    assert out.shape == (B, E, 4, 4, 4), out.shape
    err = float(jnp.max(jnp.abs(out - ref)))
    assert err < 5e-2, f"max abs error {err}"      # bf16 MXU inputs, f32 accumulate/LN

    # 2) Perf-review fast path: bf16 output + channels_last (no NCTHW permute).
    fwd_fast = jax.jit(functools.partial(special_patch_embed, patch_size=P,
                                         out_dtype=jnp.bfloat16, channels_last_out=True))
    out_fast = jax.block_until_ready(fwd_fast(x, conv_w, conv_b, ln_g, ln_b))
    assert out_fast.shape == (B, 4, 4, 4, E), out_fast.shape
    ref_last = jnp.transpose(ref, (0, 2, 3, 4, 1))
    err_fast = float(jnp.max(jnp.abs(out_fast.astype(jnp.float32) - ref_last)))
    assert err_fast < 1e-1, f"fast-path max abs error {err_fast}"

    # 3) Odd-T config exercises the clamped/gated boundary taps that replaced the zero pad.
    T2 = 7
    x2 = jax.random.normal(k1, (1, C, T2, H, W), jnp.float32)
    out2 = jax.block_until_ready(
        jax.jit(functools.partial(special_patch_embed, patch_size=P))(
            x2, conv_w, conv_b, ln_g, ln_b))
    ref2 = reference(x2, conv_w, conv_b, ln_g, ln_b, P)
    assert out2.shape == ref2.shape, (out2.shape, ref2.shape)
    err2 = float(jnp.max(jnp.abs(out2 - ref2)))
    assert err2 < 5e-2, f"odd-T max abs error {err2}"

    print("KERNEL_OK")
</pallas_src>

<mosaic_0001>
module attributes {stable_mosaic.version = 11 : i64} {
  func.func @_patch_embed_kernel(%arg0: i32, %arg1: i32, %arg2: memref<1x32x48xbf16, #tpu.memory_space<vmem>>, %arg3: memref<1x32x48xbf16, #tpu.memory_space<vmem>>, %arg4: memref<1x32x48xbf16, #tpu.memory_space<vmem>>, %arg5: memref<3x48x128xbf16, #tpu.memory_space<vmem>>, %arg6: memref<3x1x128xf32, #tpu.memory_space<vmem>>, %arg7: memref<1x32x128xf32, #tpu.memory_space<vmem>>, %arg8: memref<32x128xf32, #tpu.memory_space<vmem>>) attributes {dimension_semantics = [#tpu.dimension_semantics<parallel>, #tpu.dimension_semantics<parallel>], iteration_bounds = array<i64: 1, 4>, scalar_prefetch = 0 : i64, scratch_operands = 1 : i64, tpu.core_type = #tpu.core_type<tc>, window_params = [{transform_indices = @transform_0, window_bounds = array<i64: 1, 32, 48>}, {transform_indices = @transform_1, window_bounds = array<i64: 1, 32, 48>}, {transform_indices = @transform_2, window_bounds = array<i64: 1, 32, 48>}, {pipeline_mode = #tpu.pipeline_mode<synchronous>, transform_indices = @transform_3, window_bounds = array<i64: 3, 48, 128>}, {pipeline_mode = #tpu.pipeline_mode<synchronous>, transform_indices = @transform_4, window_bounds = array<i64: 3, 1, 128>}, {transform_indices = @transform_5, window_bounds = array<i64: 1, 32, 128>}]} {
    %c0 = arith.constant 0 : index
    %c0_0 = arith.constant 0 : index
    %c0_1 = arith.constant 0 : index
    %0 = vector.load %arg3[%c0, %c0_0, %c0_1] : memref<1x32x48xbf16, #tpu.memory_space<vmem>>, vector<1x32x48xbf16>
    %1 = vector.shape_cast %0 : vector<1x32x48xbf16> to vector<32x48xbf16>
    %c1 = arith.constant 1 : index
    %c0_2 = arith.constant 0 : index
    %c0_3 = arith.constant 0 : index
    %2 = vector.load %arg5[%c1, %c0_2, %c0_3] : memref<3x48x128xbf16, #tpu.memory_space<vmem>>, vector<1x48x128xbf16>
    %3 = vector.shape_cast %2 : vector<1x48x128xbf16> to vector<48x128xbf16>
    %cst = arith.constant dense<0.000000e+00> : vector<32x128xf32>
    %4 = tpu.matmul %1, %3, %cst {dimension_numbers = #tpu.dot_dimension_numbers<[1], [0], [0], [1], [0, 0, 1, 1], [], []>} : vector<32x48xbf16>, vector<48x128xbf16>, vector<32x128xf32> -> vector<32x128xf32>
    %c0_4 = arith.constant 0 : index
    %c0_5 = arith.constant 0 : index
    %5 = vector.load %arg8[%c0_4, %c0_5] : memref<32x128xf32, #tpu.memory_space<vmem>>, vector<32x128xf32>
    tpu.vector_store %arg8[%c0_4, %c0_5], %4 {strides = array<i32>} : memref<32x128xf32, #tpu.memory_space<vmem>>, vector<32x128xf32>,
    %c0_i32 = arith.constant 0 : i32
    %6 = arith.cmpi sgt, %arg1, %c0_i32 : i32
    %7 = arith.extui %6 : i1 to i32
    %c0_i32_6 = arith.constant 0 : i32
    %8 = arith.cmpi ne, %7, %c0_i32_6 : i32
    scf.if %8 {
      %c0_26 = arith.constant 0 : index
      %c0_27 = arith.constant 0 : index
      %48 = vector.load %arg8[%c0_26, %c0_27] : memref<32x128xf32, #tpu.memory_space<vmem>>, vector<32x128xf32>
      %c0_28 = arith.constant 0 : index
      %c0_29 = arith.constant 0 : index
      %c0_30 = arith.constant 0 : index
      %49 = vector.load %arg2[%c0_28, %c0_29, %c0_30] : memref<1x32x48xbf16, #tpu.memory_space<vmem>>, vector<1x32x48xbf16>
      %50 = vector.shape_cast %49 : vector<1x32x48xbf16> to vector<32x48xbf16>
      %c0_31 = arith.constant 0 : index
      %c0_32 = arith.constant 0 : index
      %c0_33 = arith.constant 0 : index
      %51 = vector.load %arg5[%c0_31, %c0_32, %c0_33] : memref<3x48x128xbf16, #tpu.memory_space<vmem>>, vector<1x48x128xbf16>
      %52 = vector.shape_cast %51 : vector<1x48x128xbf16> to vector<48x128xbf16>
      %cst_34 = arith.constant dense<0.000000e+00> : vector<32x128xf32>
      %53 = tpu.matmul %50, %52, %cst_34 {dimension_numbers = #tpu.dot_dimension_numbers<[1], [0], [0], [1], [0, 0, 1, 1], [], []>} : vector<32x48xbf16>, vector<48x128xbf16>, vector<32x128xf32> -> vector<32x128xf32>
      %54 = arith.addf %48, %53 : vector<32x128xf32>
      %c0_35 = arith.constant 0 : index
      %c0_36 = arith.constant 0 : index
      %55 = vector.load %arg8[%c0_35, %c0_36] : memref<32x128xf32, #tpu.memory_space<vmem>>, vector<32x128xf32>
      tpu.vector_store %arg8[%c0_35, %c0_36], %54 {strides = array<i32>} : memref<32x128xf32, #tpu.memory_space<vmem>>, vector<32x128xf32>,
    } else {
    }
    %c2_i32 = arith.constant 2 : i32
    %9 = arith.muli %c2_i32, %arg1 : i32
    %c1_i32 = arith.constant 1 : i32
    %10 = arith.addi %9, %c1_i32 : i32
    %c8_i32 = arith.constant 8 : i32
    %11 = arith.cmpi slt, %10, %c8_i32 : i32
    %12 = arith.extui %11 : i1 to i32
    %c0_i32_7 = arith.constant 0 : i32
    %13 = arith.cmpi ne, %12, %c0_i32_7 : i32
    scf.if %13 {
      %c0_26 = arith.constant 0 : index
      %c0_27 = arith.constant 0 : index
      %48 = vector.load %arg8[%c0_26, %c0_27] : memref<32x128xf32, #tpu.memory_space<vmem>>, vector<32x128xf32>
      %c0_28 = arith.constant 0 : index
      %c0_29 = arith.constant 0 : index
      %c0_30 = arith.constant 0 : index
      %49 = vector.load %arg4[%c0_28, %c0_29, %c0_30] : memref<1x32x48xbf16, #tpu.memory_space<vmem>>, vector<1x32x48xbf16>
      %50 = vector.shape_cast %49 : vector<1x32x48xbf16> to vector<32x48xbf16>
      %c2_31 = arith.constant 2 : index
      %c0_32 = arith.constant 0 : index
      %c0_33 = arith.constant 0 : index
      %51 = vector.load %arg5[%c2_31, %c0_32, %c0_33] : memref<3x48x128xbf16, #tpu.memory_space<vmem>>, vector<1x48x128xbf16>
      %52 = vector.shape_cast %51 : vector<1x48x128xbf16> to vector<48x128xbf16>
      %cst_34 = arith.constant dense<0.000000e+00> : vector<32x128xf32>
      %53 = tpu.matmul %50, %52, %cst_34 {dimension_numbers = #tpu.dot_dimension_numbers<[1], [0], [0], [1], [0, 0, 1, 1], [], []>} : vector<32x48xbf16>, vector<48x128xbf16>, vector<32x128xf32> -> vector<32x128xf32>
      %54 = arith.addf %48, %53 : vector<32x128xf32>
      %c0_35 = arith.constant 0 : index
      %c0_36 = arith.constant 0 : index
      %55 = vector.load %arg8[%c0_35, %c0_36] : memref<32x128xf32, #tpu.memory_space<vmem>>, vector<32x128xf32>
      tpu.vector_store %arg8[%c0_35, %c0_36], %54 {strides = array<i32>} : memref<32x128xf32, #tpu.memory_space<vmem>>, vector<32x128xf32>,
    } else {
    }
    %c0_8 = arith.constant 0 : index
    %c0_9 = arith.constant 0 : index
    %14 = vector.load %arg8[%c0_8, %c0_9] : memref<32x128xf32, #tpu.memory_space<vmem>>, vector<32x128xf32>
    %c0_10 = arith.constant 0 : index
    %c0_11 = arith.constant 0 : index
    %c0_12 = arith.constant 0 : index
    %15 = vector.load %arg6[%c0_10, %c0_11, %c0_12] : memref<3x1x128xf32, #tpu.memory_space<vmem>>, vector<1x1x128xf32>
    %16 = vector.shape_cast %15 : vector<1x1x128xf32> to vector<1x128xf32>
    %17 = vector.broadcast %16 : vector<1x128xf32> to vector<32x128xf32>
    %18 = arith.addf %14, %17 : vector<32x128xf32>
    %cst_13 = arith.constant dense<0.000000e+00> : vector<32xf32>
    %19 = vector.multi_reduction <add>, %18, %cst_13 [1] : vector<32x128xf32> to vector<32xf32>
    %20 = vector.shape_cast %19 : vector<32xf32> to vector<32x1xf32>
    %cst_14 = arith.constant 1.280000e+02 : f32
    %21 = vector.broadcast %cst_14 : f32 to vector<32x1xf32>
    %22 = arith.divf %20, %21 : vector<32x1xf32>
    %23 = arith.mulf %18, %18 : vector<32x128xf32>
    %cst_15 = arith.constant dense<0.000000e+00> : vector<32xf32>
    %24 = vector.multi_reduction <add>, %23, %cst_15 [1] : vector<32x128xf32> to vector<32xf32>
    %25 = vector.shape_cast %24 : vector<32xf32> to vector<32x1xf32>
    %cst_16 = arith.constant 1.280000e+02 : f32
    %26 = vector.broadcast %cst_16 : f32 to vector<32x1xf32>
    %27 = arith.divf %25, %26 : vector<32x1xf32>
    %28 = arith.mulf %22, %22 : vector<32x1xf32>
    %29 = arith.subf %27, %28 : vector<32x1xf32>
    %cst_17 = arith.constant 9.99999974E-6 : f32
    %30 = vector.broadcast %cst_17 : f32 to vector<32x1xf32>
    %31 = arith.addf %29, %30 : vector<32x1xf32>
    %32 = math.rsqrt %31 : vector<32x1xf32>
    %33 = vector.broadcast %22 : vector<32x1xf32> to vector<32x128xf32>
    %34 = arith.subf %18, %33 : vector<32x128xf32>
    %35 = vector.broadcast %32 : vector<32x1xf32> to vector<32x128xf32>
    %36 = arith.mulf %34, %35 : vector<32x128xf32>
    %c1_18 = arith.constant 1 : index
    %c0_19 = arith.constant 0 : index
    %c0_20 = arith.constant 0 : index
    %37 = vector.load %arg6[%c1_18, %c0_19, %c0_20] : memref<3x1x128xf32, #tpu.memory_space<vmem>>, vector<1x1x128xf32>
    %38 = vector.shape_cast %37 : vector<1x1x128xf32> to vector<1x128xf32>
    %39 = vector.broadcast %38 : vector<1x128xf32> to vector<32x128xf32>
    %40 = arith.mulf %36, %39 : vector<32x128xf32>
    %c2 = arith.constant 2 : index
    %c0_21 = arith.constant 0 : index
    %c0_22 = arith.constant 0 : index
    %41 = vector.load %arg6[%c2, %c0_21, %c0_22] : memref<3x1x128xf32, #tpu.memory_space<vmem>>, vector<1x1x128xf32>
    %42 = vector.shape_cast %41 : vector<1x1x128xf32> to vector<1x128xf32>
    %43 = vector.broadcast %42 : vector<1x128xf32> to vector<32x128xf32>
    %44 = arith.addf %40, %43 : vector<32x128xf32>
    %c0_23 = arith.constant 0 : index
    %c0_24 = arith.constant 0 : index
    %c0_25 = arith.constant 0 : index
    %45 = vector.load %arg7[%c0_23, %c0_24, %c0_25] : memref<1x32x128xf32, #tpu.memory_space<vmem>>, vector<1x32x128xf32>
    %46 = vector.shape_cast %45 : vector<1x32x128xf32> to vector<32x128xf32>
    %47 = vector.shape_cast %44 : vector<32x128xf32> to vector<1x32x128xf32>
    tpu.vector_store %arg7[%c0_23, %c0_24, %c0_25], %47 {strides = array<i32>} : memref<1x32x128xf32, #tpu.memory_space<vmem>>, vector<1x32x128xf32>,
    return
  }
  func.func @transform_0(%arg0: i32, %arg1: i32) -> (i32, i32, i32) {
    %c2_i32 = arith.constant 2 : i32
    %0 = arith.muli %c2_i32, %arg1 : i32
    %c1_i32 = arith.constant 1 : i32
    %1 = arith.subi %0, %c1_i32 : i32
    %c0_i32 = arith.constant 0 : i32
    %2 = arith.maxsi %1, %c0_i32 : i32
    %c0_i32_0 = arith.constant 0 : i32
    %c0_i32_1 = arith.constant 0 : i32
    return %2, %arg0, %c0_i32_0 : i32, i32, i32
  }
  func.func @transform_1(%arg0: i32, %arg1: i32) -> (i32, i32, i32) {
    %c2_i32 = arith.constant 2 : i32
    %0 = arith.muli %c2_i32, %arg1 : i32
    %c0_i32 = arith.constant 0 : i32
    %c0_i32_0 = arith.constant 0 : i32
    return %0, %arg0, %c0_i32 : i32, i32, i32
  }
  func.func @transform_2(%arg0: i32, %arg1: i32) -> (i32, i32, i32) {
    %c2_i32 = arith.constant 2 : i32
    %0 = arith.muli %c2_i32, %arg1 : i32
    %c1_i32 = arith.constant 1 : i32
    %1 = arith.addi %0, %c1_i32 : i32
    %c7_i32 = arith.constant 7 : i32
    %2 = arith.minsi %1, %c7_i32 : i32
    %c0_i32 = arith.constant 0 : i32
    %c0_i32_0 = arith.constant 0 : i32
    return %2, %arg0, %c0_i32 : i32, i32, i32
  }
  func.func @transform_3(%arg0: i32, %arg1: i32) -> (i32, i32, i32) {
    %c0_i32 = arith.constant 0 : i32
    %c0_i32_0 = arith.constant 0 : i32
    %c0_i32_1 = arith.constant 0 : i32
    %c0_i32_2 = arith.constant 0 : i32
    return %c0_i32, %c0_i32_0, %c0_i32_1 : i32, i32, i32
  }
  func.func @transform_4(%arg0: i32, %arg1: i32) -> (i32, i32, i32) {
    %c0_i32 = arith.constant 0 : i32
    %c0_i32_0 = arith.constant 0 : i32
    %c0_i32_1 = arith.constant 0 : i32
    %c0_i32_2 = arith.constant 0 : i32
    return %c0_i32, %c0_i32_0, %c0_i32_1 : i32, i32, i32
  }
  func.func @transform_5(%arg0: i32, %arg1: i32) -> (i32, i32, i32) {
    %c0_i32 = arith.constant 0 : i32
    %c0_i32_0 = arith.constant 0 : i32
    return %arg1, %arg0, %c0_i32 : i32, i32, i32
  }
}

</mosaic_0001>

<llo_original>
// kernel: special_patch_embed.1
$region0: #{special_patch_embed.1}
  #allocation0 [shape = 'u32[]', space=smem, size = 0x4, offset = 0x4, fixed_abs, tag = 'smem constant byte address 0x4 - core index']
  #allocation1 [shape = 'u32[144,128]{1,0:T(1,128)}', space=vmem, size = 0x12000, scoped, tag = 'internal scratch']
  #allocation2 [shape = 'f32[32,128]{1,0:T(8,128)}', space=vmem, size = 0x4000, scoped, tag = 'scratch operand']
  %s0 = inlined_call_operand.vmem [shape: bf16[8,32,48], index: 0, kind: input, shape index: {}, may-alias: {0,1,2}]
  %s1 = inlined_call_operand.vmem [shape: bf16[8,32,48], index: 1, kind: input, shape index: {}, may-alias: {0,1,2}]
  %s2 = inlined_call_operand.vmem [shape: bf16[8,32,48], index: 2, kind: input, shape index: {}, may-alias: {0,1,2}]
  %s3 = inlined_call_operand.vmem [shape: bf16[3,48,128], index: 3, kind: input, shape index: {}]
  %s4 = inlined_call_operand.vmem [shape: f32[3,1,128], index: 4, kind: input, shape index: {}]
  %s5 = inlined_call_operand.vmem [shape: f32[4,32,128], index: 5, kind: output, shape index: {}]
  %s6 = sld [smem:[#allocation0]]
  $region61: #{special_patch_embed.1} parent=0
    _
  %s8 = ssub.s32 1, %s6
  %s9 = scalar_select 0, %s8, %s6
  loop: start=0, step=1, limit=6
  $region2: #{special_patch_embed.1} parent=0 // loop_pre_header
    _
  $region3: #{special_patch_embed.1} parent=0 // loop_header
    %s11 = sphi 0, %s15
    %p12 = scmp.ge.s32.totalorder %s11, 6
    %s18 = sphi 0, %s30
    %s19 = sphi 0, %s26
    %s20 = sphi 0, %s18
    %s21 = sphi 0, %s19
    %s22 = sphi 0, %s20
    %s23 = sphi 0, %s21
    %s43 = sphi 0, %s45
    %s46 = sphi 0, %s43
    %s47 = sphi 0, %s46
    %s63 = sphi 0, %s47
    %s73 = sphi 0, %s75
    %s76 = sphi 0, %s73
    %s77 = sphi 0, %s76
    %s93 = sphi 0, %s77
    %s109 = sphi 0, %s111
    %s112 = sphi 0, %s109
    %s113 = sphi 0, %s112
    %s129 = sphi 0, %s113
    %s133 = sphi 0, %s133
    %s135 = sphi 0, %s133
    %s136 = sphi 0, %s135
    %s150 = sphi 0, %s136
    %s154 = sphi 0, %s154
    %s156 = sphi 0, %s154
    %s157 = sphi 0, %s156
    %s171 = sphi 0, %s157
    %s179 = sphi 0, %s181
    %s182 = sphi 0, %s179
    %s183 = sphi 0, %s182
    %s199 = sphi 0, %s183
  $region4: #{special_patch_embed.1} parent=0 // loop_header_branch
    %14 = sbr.rel (%p12) target = $region8
  $region5: #{special_patch_embed.1} parent=0 // loop_body
    %s16 = ssub.s32 %s11, 1
    %s17 = ssub.s32 %s11, 2
    %s24 = sadd.s32 1, %s19
    %p25 = scmp.ge.s32.totalorder %s24, 4
    %s26 = scalar_select %p25, 0, %s24
    %s27 = sadd.s32 1, %s18
    %s28 = scalar_select %p25, %s27, %s18
    %p29 = scmp.ge.s32.totalorder %s28, 1
    %s30 = scalar_select %p29, 0, %s28
    %s31 = smul.u32 %s19, 2
    %s32 = ssub.s32 %s31, 1
    %p33 = scmp.gt.s32.totalorder %s32, 0
    %s34 = scalar_select %p33, %s32, 0
    %s35 = smul.u32 %s26, 2
    %s36 = ssub.s32 %s35, 1
    %p37 = scmp.gt.s32.totalorder %s36, 0
    %s38 = scalar_select %p37, %s36, 0
    %s39 = ssub.s32 %s34, %s38
    %s40 = ssub.s32 %s18, %s30
    %s41 = sor.u32 %s39, %s40
    %p42 = scmp.eq.s32.totalorder %s41, 0
    %s44 = sadd.s32 %s43, 1
    %s45 = scalar_select %p42, %s43, %s44
    %p48 = pneg %p42
    %p49 = scmp.eq.s32.totalorder %s11, 3
    %p50 = por %p48, %p49
    %p51 = scmp.ne.s32.totalorder %s43, %s46
    %p52 = scmp.eq.s32.totalorder %s11, 0
    %p53 = por %p51, %p52
    %p54 = scmp.ne.s32.totalorder %s43, %s46
    %p55 = scmp.eq.s32.totalorder %s16, 3
    %p56 = por %p54, %p55
    %p57 = scmp.ne.s32.totalorder %s46, %s47
    %p58 = scmp.eq.s32.totalorder %s16, 0
    %p59 = por %p57, %p58
    %p60 = scmp.ne.s32.totalorder %s46, %s47
    %p61 = scmp.eq.s32.totalorder %s17, 3
    %p62 = por %p60, %p61
    %p64 = scmp.ne.s32.totalorder %s47, %s63
    %p65 = scmp.eq.s32.totalorder %s17, 0
    %p66 = por %p64, %p65
    %s67 = smul.u32 %s19, 2
    %s68 = smul.u32 %s26, 2
    %s69 = ssub.s32 %s67, %s68
    %s70 = ssub.s32 %s18, %s30
    %s71 = sor.u32 %s69, %s70
    %p72 = scmp.eq.s32.totalorder %s71, 0
    %s74 = sadd.s32 %s73, 1
    %s75 = scalar_select %p72, %s73, %s74
    %p78 = pneg %p72
    %p79 = scmp.eq.s32.totalorder %s11, 3
    %p80 = por %p78, %p79
    %p81 = scmp.ne.s32.totalorder %s73, %s76
    %p82 = scmp.eq.s32.totalorder %s11, 0
    %p83 = por %p81, %p82
    %p84 = scmp.ne.s32.totalorder %s73, %s76
    %p85 = scmp.eq.s32.totalorder %s16, 3
    %p86 = por %p84, %p85
    %p87 = scmp.ne.s32.totalorder %s76, %s77
    %p88 = scmp.eq.s32.totalorder %s16, 0
    %p89 = por %p87, %p88
    %p90 = scmp.ne.s32.totalorder %s76, %s77
    %p91 = scmp.eq.s32.totalorder %s17, 3
    %p92 = por %p90, %p91
    %p94 = scmp.ne.s32.totalorder %s77, %s93
    %p95 = scmp.eq.s32.totalorder %s17, 0
    %p96 = por %p94, %p95
    %s97 = smul.u32 %s19, 2
    %s98 = sadd.s32 %s97, 1
    %p99 = scmp.lt.s32.totalorder %s98, 7
    %s100 = scalar_select %p99, %s98, 7
    %s101 = smul.u32 %s26, 2
    %s102 = sadd.s32 %s101, 1
    %p103 = scmp.lt.s32.totalorder %s102, 7
    %s104 = scalar_select %p103, %s102, 7
    %s105 = ssub.s32 %s100, %s104
    %s106 = ssub.s32 %s18, %s30
    %s107 = sor.u32 %s105, %s106
    %p108 = scmp.eq.s32.totalorder %s107, 0
    %s110 = sadd.s32 %s109, 1
    %s111 = scalar_select %p108, %s109, %s110
    %p114 = pneg %p108
    %p115 = scmp.eq.s32.totalorder %s11, 3
    %p116 = por %p114, %p115
    %p117 = scmp.ne.s32.totalorder %s109, %s112
    %p118 = scmp.eq.s32.totalorder %s11, 0
    %p119 = por %p117, %p118
    %p120 = scmp.ne.s32.totalorder %s109, %s112
    %p121 = scmp.eq.s32.totalorder %s16, 3
    %p122 = por %p120, %p121
    %p123 = scmp.ne.s32.totalorder %s112, %s113
    %p124 = scmp.eq.s32.totalorder %s16, 0
    %p125 = por %p123, %p124
    %p126 = scmp.ne.s32.totalorder %s112, %s113
    %p127 = scmp.eq.s32.totalorder %s17, 3
    %p128 = por %p126, %p127
    %p130 = scmp.ne.s32.totalorder %s113, %s129
    %p131 = scmp.eq.s32.totalorder %s17, 0
    %p132 = por %p130, %p131
    %s134 = sadd.s32 %s133, 1
    %p137 = scmp.eq.s32.totalorder %s11, 3
    %p138 = scmp.ne.s32.totalorder %s133, %s135
    %p139 = scmp.eq.s32.totalorder %s11, 0
    %p140 = por %p138, %p139
    %p141 = scmp.ne.s32.totalorder %s133, %s135
    %p142 = scmp.eq.s32.totalorder %s16, 3
    %p143 = por %p141, %p142
    %p144 = scmp.ne.s32.totalorder %s135, %s136
    %p145 = scmp.eq.s32.totalorder %s16, 0
    %p146 = por %p144, %p145
    %p147 = scmp.ne.s32.totalorder %s135, %s136
    %p148 = scmp.eq.s32.totalorder %s17, 3
    %p149 = por %p147, %p148
    %p151 = scmp.ne.s32.totalorder %s136, %s150
    %p152 = scmp.eq.s32.totalorder %s17, 0
    %p153 = por %p151, %p152
    %s155 = sadd.s32 %s154, 1
    %p158 = scmp.eq.s32.totalorder %s11, 3
    %p159 = scmp.ne.s32.totalorder %s154, %s156
    %p160 = scmp.eq.s32.totalorder %s11, 0
    %p161 = por %p159, %p160
    %p162 = scmp.ne.s32.totalorder %s154, %s156
    %p163 = scmp.eq.s32.totalorder %s16, 3
    %p164 = por %p162, %p163
    %p165 = scmp.ne.s32.totalorder %s156, %s157
    %p166 = scmp.eq.s32.totalorder %s16, 0
    %p167 = por %p165, %p166
    %p168 = scmp.ne.s32.totalorder %s156, %s157
    %p169 = scmp.eq.s32.totalorder %s17, 3
    %p170 = por %p168, %p169
    %p172 = scmp.ne.s32.totalorder %s157, %s171
    %p173 = scmp.eq.s32.totalorder %s17, 0
    %p174 = por %p172, %p173
    %s175 = ssub.s32 %s19, %s26
    %s176 = ssub.s32 %s18, %s30
    %s177 = sor.u32 %s175, %s176
    %p178 = scmp.eq.s32.totalorder %s177, 0
    %s180 = sadd.s32 %s179, 1
    %s181 = scalar_select %p178, %s179, %s180
    %p184 = pneg %p178
    %p185 = scmp.eq.s32.totalorder %s11, 3
    %p186 = por %p184, %p185
    %p187 = scmp.ne.s32.totalorder %s179, %s182
    %p188 = scmp.eq.s32.totalorder %s11, 0
    %p189 = por %p187, %p188
    %p190 = scmp.ne.s32.totalorder %s179, %s182
    %p191 = scmp.eq.s32.totalorder %s16, 3
    %p192 = por %p190, %p191
    %p193 = scmp.ne.s32.totalorder %s182, %s183
    %p194 = scmp.eq.s32.totalorder %s16, 0
    %p195 = por %p193, %p194
    %p196 = scmp.ne.s32.totalorder %s182, %s183
    %p197 = scmp.eq.s32.totalorder %s17, 3
    %p198 = por %p196, %p197
    %p200 = scmp.ne.s32.totalorder %s183, %s199
    %p201 = scmp.eq.s32.totalorder %s17, 0
    %p202 = por %p200, %p201
    %p203 = scmp.le.s32.totalorder 1, %s11
    %p204 = scmp.lt.s32.totalorder %s11, 5
    %p205 = pnand %p203, %p204
    %p206 = pneg %p205
    // Predicated region
    $region9: #{special_patch_embed.1} parent=5 // pred_check
      _
    $region10: #{special_patch_embed.1} parent=5 // pred_check_branch
      %208 = sbr.rel (%p205) target = $region12
    $region11: #{special_patch_embed.1} parent=5 // pred_region
      %s209 = ssub.s32 %s11, 1
      // Predicated region
      $region13: #{special_patch_embed.1} parent=11 // pred_check
        %p210 = pneg %p146
      $region14: #{special_patch_embed.1} parent=11 // pred_check_branch
        %212 = sbr.rel (%p210) target = $region16
      $region15: #{special_patch_embed.1} parent=11 // pred_region
        _
      $region16: #{special_patch_embed.1} parent=11 // pred_fallthru
        _
      // Predicated region
      $region17: #{special_patch_embed.1} parent=11 // pred_check
        %p213 = pneg %p167
      $region18: #{special_patch_embed.1} parent=11 // pred_check_branch
        %215 = sbr.rel (%p213) target = $region20
      $region19: #{special_patch_embed.1} parent=11 // pred_region
        _
      $region20: #{special_patch_embed.1} parent=11 // pred_fallthru
        _
    $region12: #{special_patch_embed.1} parent=5 // pred_fallthru
      _
    %p216 = scmp.lt.s32.totalorder %s11, 4
    // Predicated region
    $region21: #{special_patch_embed.1} parent=5 // pred_check
      %p217 = pneg %p216
    $region22: #{special_patch_embed.1} parent=5 // pred_check_branch
      %219 = sbr.rel (%p217) target = $region24
    $region23: #{special_patch_embed.1} parent=5 // pred_region
      // Predicated region
      $region25: #{special_patch_embed.1} parent=23 // pred_check
        %p220 = pneg %p53
      $region26: #{special_patch_embed.1} parent=23 // pred_check_branch
        %222 = sbr.rel (%p220) target = $region28
      $region27: #{special_patch_embed.1} parent=23 // pred_region
        %s223 = smul.u32 %s19, 2
        %s224 = ssub.s32 %s223, 1
        %p225 = scmp.gt.s32.totalorder %s224, 0
        %s226 = scalar_select %p225, %s224, 0
        %s227 = smul.u32 4, %s18
        %p228 = scmp.lt.s32.totalorder %s226, 7
        %s229 = scalar_select %p228, %s226, 7
        %p230 = scmp.lt.s32.totalorder %s227, 3
        %s231 = scalar_select %p230, %s227, 3
        %s232 = smul.addr %s229, 4
        %s233 = sadd.s32 %s231, %s232
        %s234 = smul.addr %s233, 4
        %s235 = scalar_lea.vmem %s0, %s234
        %s236 = smul.u32 %s19, 2
        %s237 = ssub.s32 %s236, 1
        %p238 = scmp.gt.s32.totalorder %s237, 0
        %s239 = scalar_select %p238, %s237, 0
        %s240 = smul.u32 4, %s18
      $region28: #{special_patch_embed.1} parent=23 // pred_fallthru
        _
      // Predicated region
      $region29: #{special_patch_embed.1} parent=23 // pred_check
        %p241 = pneg %p83
      $region30: #{special_patch_embed.1} parent=23 // pred_check_branch
        %243 = sbr.rel (%p241) target = $region32
      $region31: #{special_patch_embed.1} parent=23 // pred_region
        %s244 = smul.u32 %s19, 2
        %s245 = smul.u32 4, %s18
        %p246 = scmp.lt.s32.totalorder %s244, 7
        %s247 = scalar_select %p246, %s244, 7
        %p248 = scmp.lt.s32.totalorder %s245, 3
        %s249 = scalar_select %p248, %s245, 3
        %s250 = smul.addr %s247, 4
        %s251 = sadd.s32 %s249, %s250
        %s252 = smul.addr %s251, 4
        %s253 = scalar_lea.vmem %s1, %s252
        %s254 = smul.u32 %s19, 2
        %s255 = smul.u32 4, %s18
      $region32: #{special_patch_embed.1} parent=23 // pred_fallthru
        _
      // Predicated region
      $region33: #{special_patch_embed.1} parent=23 // pred_check
        %p256 = pneg %p119
      $region34: #{special_patch_embed.1} parent=23 // pred_check_branch
        %258 = sbr.rel (%p256) target = $region36
      $region35: #{special_patch_embed.1} parent=23 // pred_region
        %s259 = smul.u32 %s19, 2
        %s260 = sadd.s32 %s259, 1
        %p261 = scmp.lt.s32.totalorder %s260, 7
        %s262 = scalar_select %p261, %s260, 7
        %s263 = smul.u32 4, %s18
        %p264 = scmp.lt.s32.totalorder %s262, 7
        %s265 = scalar_select %p264, %s262, 7
        %p266 = scmp.lt.s32.totalorder %s263, 3
        %s267 = scalar_select %p266, %s263, 3
        %s268 = smul.addr %s265, 4
        %s269 = sadd.s32 %s267, %s268
        %s270 = smul.addr %s269, 4
        %s271 = scalar_lea.vmem %s2, %s270
        %s272 = smul.u32 %s19, 2
        %s273 = sadd.s32 %s272, 1
        %p274 = scmp.lt.s32.totalorder %s273, 7
        %s275 = scalar_select %p274, %s273, 7
        %s276 = smul.u32 4, %s18
      $region36: #{special_patch_embed.1} parent=23 // pred_fallthru
        _
    $region24: #{special_patch_embed.1} parent=5 // pred_fallthru
      _
    %p277 = scmp.le.s32.totalorder 1, %s11
    %p278 = scmp.lt.s32.totalorder %s11, 5
    %p279 = pnand %p277, %p278
    %p280 = pneg %p279
    // Predicated region
    $region37: #{special_patch_embed.1} parent=5 // pred_check
      _
    $region38: #{special_patch_embed.1} parent=5 // pred_check_branch
      %282 = sbr.rel (%p279) target = $region40
    $region39: #{special_patch_embed.1} parent=5 // pred_region
      %s283 = ssub.s32 %s11, 1
      %s284 = smul.u32 %s21, 2
      %s285 = ssub.s32 %s284, 1
      %p286 = scmp.gt.s32.totalorder %s285, 0
      %s287 = scalar_select %p286, %s285, 0
      %s288 = smul.u32 4, %s20
      %p289 = scmp.lt.s32.totalorder %s287, 7
      %s290 = scalar_select %p289, %s287, 7
      %p291 = scmp.lt.s32.totalorder %s288, 3
      %s292 = scalar_select %p291, %s288, 3
      %s293 = smul.addr %s290, 4
      %s294 = sadd.s32 %s292, %s293
      %s295 = smul.addr %s294, 4
      %s296 = scalar_lea.vmem %s0, %s295
      %p297 = pneg %p59
      %p298 = pneg %p56
      %s299 = smul.u32 %s21, 2
      %s300 = smul.u32 4, %s20
      %p301 = scmp.lt.s32.totalorder %s299, 7
      %s302 = scalar_select %p301, %s299, 7
      %p303 = scmp.lt.s32.totalorder %s300, 3
      %s304 = scalar_select %p303, %s300, 3
      %s305 = smul.addr %s302, 4
      %s306 = sadd.s32 %s304, %s305
      %s307 = smul.addr %s306, 4
      %s308 = scalar_lea.vmem %s1, %s307
      %p309 = pneg %p89
      %p310 = pneg %p86
      %s311 = smul.u32 %s21, 2
      %s312 = sadd.s32 %s311, 1
      %p313 = scmp.lt.s32.totalorder %s312, 7
      %s314 = scalar_select %p313, %s312, 7
      %s315 = smul.u32 4, %s20
      %p316 = scmp.lt.s32.totalorder %s314, 7
      %s317 = scalar_select %p316, %s314, 7
      %p318 = scmp.lt.s32.totalorder %s315, 3
      %s319 = scalar_select %p318, %s315, 3
      %s320 = smul.addr %s317, 4
      %s321 = sadd.s32 %s319, %s320
      %s322 = smul.addr %s321, 4
      %s323 = scalar_lea.vmem %s2, %s322
      %p324 = pneg %p125
      %p325 = pneg %p122
      %p326 = pneg %p146
      %p327 = pneg %p143
      %p328 = pneg %p167
      %p329 = pneg %p164
      %p330 = pneg %p195
      %p331 = pneg %p192
      %s332 = smul.u32 4, %s20
      %p333 = scmp.lt.s32.totalorder %s21, 3
      %s334 = scalar_select %p333, %s21, 3
      %p335 = scmp.lt.s32.totalorder %s332, 3
      %s336 = scalar_select %p335, %s332, 3
      %s337 = smul.addr %s334, 4
      %s338 = sadd.s32 %s336, %s337
      %s339 = smul.addr %s338, 8
      %s340 = scalar_lea.vmem %s5, %s339
      %s341 = smul.u32 %s21, 2
      %s342 = ssub.s32 %s341, 1
      %p343 = scmp.gt.s32.totalorder %s342, 0
      %s344 = scalar_select %p343, %s342, 0
      %s345 = smul.u32 4, %s20
      %p346 = scmp.lt.s32.totalorder %s344, 7
      %s347 = scalar_select %p346, %s344, 7
      %p348 = scmp.lt.s32.totalorder %s345, 3
      %s349 = scalar_select %p348, %s345, 3
      %s350 = smul.addr %s347, 4
      %s351 = sadd.s32 %s349, %s350
      %s352 = smul.addr %s351, 4
      %s353 = scalar_lea.vmem %s0, %s352
      %s354 = smul.u32 %s21, 2
      %s355 = ssub.s32 %s354, 1
      %p356 = scmp.gt.s32.totalorder %s355, 0
      %s357 = scalar_select %p356, %s355, 0
      %s358 = smul.u32 4, %s20
      %s359 = smul.u32 %s21, 2
      %s360 = smul.u32 4, %s20
      %p361 = scmp.lt.s32.totalorder %s359, 7
      %s362 = scalar_select %p361, %s359, 7
      %p363 = scmp.lt.s32.totalorder %s360, 3
      %s364 = scalar_select %p363, %s360, 3
      %s365 = smul.addr %s362, 4
      %s366 = sadd.s32 %s364, %s365
      %s367 = smul.addr %s366, 4
      %s368 = scalar_lea.vmem %s1, %s367
      %s369 = smul.u32 %s21, 2
      %s370 = smul.u32 4, %s20
      %s371 = smul.u32 %s21, 2
      %s372 = sadd.s32 %s371, 1
      %p373 = scmp.lt.s32.totalorder %s372, 7
      %s374 = scalar_select %p373, %s372, 7
      %s375 = smul.u32 4, %s20
      %p376 = scmp.lt.s32.totalorder %s374, 7
      %s377 = scalar_select %p376, %s374, 7
      %p378 = scmp.lt.s32.totalorder %s375, 3
      %s379 = scalar_select %p378, %s375, 3
      %s380 = smul.addr %s377, 4
      %s381 = sadd.s32 %s379, %s380
      %s382 = smul.addr %s381, 4
      %s383 = scalar_lea.vmem %s2, %s382
      %s384 = smul.u32 %s21, 2
      %s385 = sadd.s32 %s384, 1
      %p386 = scmp.lt.s32.totalorder %s385, 7
      %s387 = scalar_select %p386, %s385, 7
      %s388 = smul.u32 4, %s20
      %s389 = smul.u32 4, %s20
      %p390 = scmp.lt.s32.totalorder %s21, 3
      %s391 = scalar_select %p390, %s21, 3
      %p392 = scmp.lt.s32.totalorder %s389, 3
      %s393 = scalar_select %p392, %s389, 3
      %s394 = smul.addr %s391, 4
      %s395 = sadd.s32 %s393, %s394
      %s396 = smul.addr %s395, 8
      %s397 = scalar_lea.vmem %s5, %s396
      %s398 = smul.u32 4, %s20
      %v400 = vld [vmem:[%s368] sm:$0xf]
      %v401 = vld [vmem:[%s368 + $0x4] sm:$0xf]
      %v402 = vld [vmem:[%s368 + $0x8] sm:$0xf]
      %v403 = vld [vmem:[%s368 + $0xc] sm:$0xf]
      %s404 = scalar_lea.vmem %s3, 24
      %v405 = vld [vmem:[%s404] sm:$0xf]
      %v406 = vld [vmem:[%s404 + $0x4] sm:$0xf]
      %v407 = vld [vmem:[%s404 + $0x8] sm:$0xf]
      %v408 = vld [vmem:[%s404 + $0xc] sm:$0xf]
      %v409 = vld [vmem:[%s404 + $0x10] sm:$0xf]
      %v410 = vld [vmem:[%s404 + $0x14] sm:$0xf]
      %v415 = vunpack.c.l.b16 %v400
      %v416 = vunpack.c.l.b16 %v401
      %v417 = vunpack.c.l.b16 %v402
      %v418 = vunpack.c.l.b16 %v403
      %v419 = vpack.c.b16 %v416, %v415
      %v420 = vpack.c.b16 %v418, %v417
      %v427 = vunpack.c.l.b16 %v405
      %v428 = vunpack.c.l.b16 %v406
      %v429 = vunpack.c.l.b16 %v407
      %v430 = vunpack.c.l.b16 %v408
      %v431 = vunpack.c.l.b16 %v409
      %v432 = vunpack.c.l.b16 %v410
      %v433 = vpack.c.b16 %v428, %v427
      %v434 = vpack.c.b16 %v430, %v429
      %v435 = vpack.c.b16 %v432, %v431
      %vm439 = vcmask 392192
      %v441 = vsel %vm439, %v419, 0
      %v444 = vsel %vm439, %v420, 0
      %446 = vmatprep.subr.bf16.mxu0 0
      %447 = vmatpush1.bf16.msra.mxu0 %v433
      %448 = vmatprep.subr.bf16.mxu0 0
      %449 = vmatpush1.bf16.msra.mxu0 %v434
      %450 = vmatprep.subr.bf16.mxu0 0
      %451 = vmatpush1.bf16.msra.mxu0 %v435
      %452 = vmatprep.subr.bf16.mxu0 0
      %453 = vmatpush1.bf16.msra.mxu0 0
      %454 = vmatprep.subr.bf16.mxu0 0
      %455 = vmatpush1.bf16.msra.mxu0 0
      %456 = vmatprep.subr.bf16.mxu0 0
      %457 = vmatpush1.bf16.msra.mxu0 0
      %458 = vmatprep.subr.bf16.mxu0 0
      %459 = vmatpush1.bf16.msra.mxu0 0
      %460 = vmatprep.subr.bf16.mxu0 0
      %461 = vmatpush1.bf16.msra.mxu0 0
      %462 = vmatprep.subr.bf16.mxu0 0
      %463 = vmatpush1.bf16.msra.mxu0 0
      %464 = vmatprep.subr.bf16.mxu0 0
      %465 = vmatpush1.bf16.msra.mxu0 0
      %466 = vmatprep.subr.bf16.mxu0 0
      %467 = vmatpush1.bf16.msra.mxu0 0
      %468 = vmatprep.subr.bf16.mxu0 0
      %469 = vmatpush1.bf16.msra.mxu0 0
      %470 = vmatprep.subr.bf16.mxu0 0
      %471 = vmatpush1.bf16.msra.mxu0 0
      %472 = vmatprep.subr.bf16.mxu0 0
      %473 = vmatpush1.bf16.msra.mxu0 0
      %474 = vmatprep.subr.bf16.mxu0 0
      %475 = vmatpush1.bf16.msra.mxu0 0
      %476 = vmatprep.subr.bf16.mxu0 0
      %477 = vmatpush1.bf16.msra.mxu0 0
      %478 = vmatprep.mubr.bf16.mxu0 0
      %479 = vmatmul.mubr.bf16.gmra.mrb[0].mxu0 %v441
      %v480 = vpop.f32.mrb[0].mxu0
      %v481 = vadd.f32 0.0, %v480
      %v482 = vpop.f32.mrb[0].mxu0
      %v483 = vpop.f32.mrb[0].mxu0
      %v484 = vadd.f32 0.0, %v483
      %v485 = vpop.f32.mrb[0].mxu0
      %486 = vmatprep.mubr.bf16.mxu0 0
      %487 = vmatmul.mubr.bf16.gmra.mrb[0].mxu0 %v444
      %v488 = vpop.f32.mrb[0].mxu0
      %v489 = vadd.f32 0.0, %v488
      %v490 = vpop.f32.mrb[0].mxu0
      %v491 = vpop.f32.mrb[0].mxu0
      %v492 = vadd.f32 0.0, %v491
      %v493 = vpop.f32.mrb[0].mxu0
      %494 = vdwg.mxu0
      %495 = vst [vmem:[#allocation2] sm:$0xff] %v481
      %496 = vst [vmem:[#allocation2 + $0x8] sm:$0xff] %v484
      %497 = vst [vmem:[#allocation2 + $0x10] sm:$0xff] %v489
      %498 = vst [vmem:[#allocation2 + $0x18] sm:$0xff] %v492
      %p499 = scmp.gt.s32.totalorder %s21, 0
      // Predicated region
      $region41: #{special_patch_embed.1} parent=39 // pred_check
        %p500 = pneg %p499
      $region42: #{special_patch_embed.1} parent=39 // pred_check_branch
        %502 = sbr.rel (%p500) target = $region44
      $region43: #{special_patch_embed.1} parent=39 // pred_region
        %v503 = vld [vmem:[#allocation2] sm:$0xff]
        %v504 = vld [vmem:[#allocation2 + $0x8] sm:$0xff]
        %v505 = vld [vmem:[#allocation2 + $0x10] sm:$0xff]
        %v506 = vld [vmem:[#allocation2 + $0x18] sm:$0xff]
        %v507 = vld [vmem:[%s353] sm:$0xf]
        %v508 = vld [vmem:[%s353 + $0x4] sm:$0xf]
        %v509 = vld [vmem:[%s353 + $0x8] sm:$0xf]
        %v510 = vld [vmem:[%s353 + $0xc] sm:$0xf]
        %v511 = vld [vmem:[%s3] sm:$0xf]
        %v512 = vld [vmem:[%s3 + $0x4] sm:$0xf]
        %v513 = vld [vmem:[%s3 + $0x8] sm:$0xf]
        %v514 = vld [vmem:[%s3 + $0xc] sm:$0xf]
        %v515 = vld [vmem:[%s3 + $0x10] sm:$0xf]
        %v516 = vld [vmem:[%s3 + $0x14] sm:$0xf]
        %v521 = vunpack.c.l.b16 %v507
        %v522 = vunpack.c.l.b16 %v508
        %v523 = vunpack.c.l.b16 %v509
        %v524 = vunpack.c.l.b16 %v510
        %v525 = vpack.c.b16 %v522, %v521
        %v526 = vpack.c.b16 %v524, %v523
        %v533 = vunpack.c.l.b16 %v511
        %v534 = vunpack.c.l.b16 %v512
        %v535 = vunpack.c.l.b16 %v513
        %v536 = vunpack.c.l.b16 %v514
        %v537 = vunpack.c.l.b16 %v515
        %v538 = vunpack.c.l.b16 %v516
        %v539 = vpack.c.b16 %v534, %v533
        %v540 = vpack.c.b16 %v536, %v535
        %v541 = vpack.c.b16 %v538, %v537
        %v546 = vsel %vm439, %v525, 0
        %v549 = vsel %vm439, %v526, 0
        %551 = vmatprep.subr.bf16.mxu0 0
        %552 = vmatpush1.bf16.msra.mxu0 %v539
        %553 = vmatprep.subr.bf16.mxu0 0
        %554 = vmatpush1.bf16.msra.mxu0 %v540
        %555 = vmatprep.subr.bf16.mxu0 0
        %556 = vmatpush1.bf16.msra.mxu0 %v541
        %557 = vmatprep.subr.bf16.mxu0 0
        %558 = vmatpush1.bf16.msra.mxu0 0
        %559 = vmatprep.subr.bf16.mxu0 0
        %560 = vmatpush1.bf16.msra.mxu0 0
        %561 = vmatprep.subr.bf16.mxu0 0
        %562 = vmatpush1.bf16.msra.mxu0 0
        %563 = vmatprep.subr.bf16.mxu0 0
        %564 = vmatpush1.bf16.msra.mxu0 0
        %565 = vmatprep.subr.bf16.mxu0 0
        %566 = vmatpush1.bf16.msra.mxu0 0
        %567 = vmatprep.subr.bf16.mxu0 0
        %568 = vmatpush1.bf16.msra.mxu0 0
        %569 = vmatprep.subr.bf16.mxu0 0
        %570 = vmatpush1.bf16.msra.mxu0 0
        %571 = vmatprep.subr.bf16.mxu0 0
        %572 = vmatpush1.bf16.msra.mxu0 0
        %573 = vmatprep.subr.bf16.mxu0 0
        %574 = vmatpush1.bf16.msra.mxu0 0
        %575 = vmatprep.subr.bf16.mxu0 0
        %576 = vmatpush1.bf16.msra.mxu0 0
        %577 = vmatprep.subr.bf16.mxu0 0
        %578 = vmatpush1.bf16.msra.mxu0 0
        %579 = vmatprep.subr.bf16.mxu0 0
        %580 = vmatpush1.bf16.msra.mxu0 0
        %581 = vmatprep.subr.bf16.mxu0 0
        %582 = vmatpush1.bf16.msra.mxu0 0
        %583 = vmatprep.mubr.bf16.mxu0 0
        %584 = vmatmul.mubr.bf16.gmra.mrb[0].mxu0 %v546
        %v585 = vpop.f32.mrb[0].mxu0
        %v586 = vadd.f32 0.0, %v585
        %v587 = vpop.f32.mrb[0].mxu0
        %v588 = vpop.f32.mrb[0].mxu0
        %v589 = vadd.f32 0.0, %v588
        %v590 = vpop.f32.mrb[0].mxu0
        %591 = vmatprep.mubr.bf16.mxu0 0
        %592 = vmatmul.mubr.bf16.gmra.mrb[0].mxu0 %v549
        %v593 = vpop.f32.mrb[0].mxu0
        %v594 = vadd.f32 0.0, %v593
        %v595 = vpop.f32.mrb[0].mxu0
        %v596 = vpop.f32.mrb[0].mxu0
        %v597 = vadd.f32 0.0, %v596
        %v598 = vpop.f32.mrb[0].mxu0
        %599 = vdwg.mxu0
        %v600 = vadd.f32 %v503, %v586
        %v601 = vadd.f32 %v504, %v589
        %v602 = vadd.f32 %v505, %v594
        %v603 = vadd.f32 %v506, %v597
        %604 = vst [vmem:[#allocation2] sm:$0xff] %v600
        %605 = vst [vmem:[#allocation2 + $0x8] sm:$0xff] %v601
        %606 = vst [vmem:[#allocation2 + $0x10] sm:$0xff] %v602
        %607 = vst [vmem:[#allocation2 + $0x18] sm:$0xff] %v603
      $region44: #{special_patch_embed.1} parent=39 // pred_fallthru
        _
      %s608 = smul.u32 %s21, 2
      %s609 = sadd.s32 %s608, 1
      %p610 = scmp.lt.s32.totalorder %s609, 8
      // Predicated region
      $region45: #{special_patch_embed.1} parent=39 // pred_check
        %p611 = pneg %p610
      $region46: #{special_patch_embed.1} parent=39 // pred_check_branch
        %613 = sbr.rel (%p611) target = $region48
      $region47: #{special_patch_embed.1} parent=39 // pred_region
        %v614 = vld [vmem:[#allocation2] sm:$0xff]
        %v615 = vld [vmem:[#allocation2 + $0x8] sm:$0xff]
        %v616 = vld [vmem:[#allocation2 + $0x10] sm:$0xff]
        %v617 = vld [vmem:[#allocation2 + $0x18] sm:$0xff]
        %v618 = vld [vmem:[%s383] sm:$0xf]
        %v619 = vld [vmem:[%s383 + $0x4] sm:$0xf]
        %v620 = vld [vmem:[%s383 + $0x8] sm:$0xf]
        %v621 = vld [vmem:[%s383 + $0xc] sm:$0xf]
        %s622 = scalar_lea.vmem %s3, 48
        %v623 = vld [vmem:[%s622] sm:$0xf]
        %v624 = vld [vmem:[%s622 + $0x4] sm:$0xf]
        %v625 = vld [vmem:[%s622 + $0x8] sm:$0xf]
        %v626 = vld [vmem:[%s622 + $0xc] sm:$0xf]
        %v627 = vld [vmem:[%s622 + $0x10] sm:$0xf]
        %v628 = vld [vmem:[%s622 + $0x14] sm:$0xf]
        %v633 = vunpack.c.l.b16 %v618
        %v634 = vunpack.c.l.b16 %v619
        %v635 = vunpack.c.l.b16 %v620
        %v636 = vunpack.c.l.b16 %v621
        %v637 = vpack.c.b16 %v634, %v633
        %v638 = vpack.c.b16 %v636, %v635
        %v645 = vunpack.c.l.b16 %v623
        %v646 = vunpack.c.l.b16 %v624
        %v647 = vunpack.c.l.b16 %v625
        %v648 = vunpack.c.l.b16 %v626
        %v649 = vunpack.c.l.b16 %v627
        %v650 = vunpack.c.l.b16 %v628
        %v651 = vpack.c.b16 %v646, %v645
        %v652 = vpack.c.b16 %v648, %v647
        %v653 = vpack.c.b16 %v650, %v649
        %v658 = vsel %vm439, %v637, 0
        %v661 = vsel %vm439, %v638, 0
        %663 = vmatprep.subr.bf16.mxu0 0
        %664 = vmatpush1.bf16.msra.mxu0 %v651
        %665 = vmatprep.subr.bf16.mxu0 0
        %666 = vmatpush1.bf16.msra.mxu0 %v652
        %667 = vmatprep.subr.bf16.mxu0 0
        %668 = vmatpush1.bf16.msra.mxu0 %v653
        %669 = vmatprep.subr.bf16.mxu0 0
        %670 = vmatpush1.bf16.msra.mxu0 0
        %671 = vmatprep.subr.bf16.mxu0 0
        %672 = vmatpush1.bf16.msra.mxu0 0
        %673 = vmatprep.subr.bf16.mxu0 0
        %674 = vmatpush1.bf16.msra.mxu0 0
        %675 = vmatprep.subr.bf16.mxu0 0
        %676 = vmatpush1.bf16.msra.mxu0 0
        %677 = vmatprep.subr.bf16.mxu0 0
        %678 = vmatpush1.bf16.msra.mxu0 0
        %679 = vmatprep.subr.bf16.mxu0 0
        %680 = vmatpush1.bf16.msra.mxu0 0
        %681 = vmatprep.subr.bf16.mxu0 0
        %682 = vmatpush1.bf16.msra.mxu0 0
        %683 = vmatprep.subr.bf16.mxu0 0
        %684 = vmatpush1.bf16.msra.mxu0 0
        %685 = vmatprep.subr.bf16.mxu0 0
        %686 = vmatpush1.bf16.msra.mxu0 0
        %687 = vmatprep.subr.bf16.mxu0 0
        %688 = vmatpush1.bf16.msra.mxu0 0
        %689 = vmatprep.subr.bf16.mxu0 0
        %690 = vmatpush1.bf16.msra.mxu0 0
        %691 = vmatprep.subr.bf16.mxu0 0
        %692 = vmatpush1.bf16.msra.mxu0 0
        %693 = vmatprep.subr.bf16.mxu0 0
        %694 = vmatpush1.bf16.msra.mxu0 0
        %695 = vmatprep.mubr.bf16.mxu0 0
        %696 = vmatmul.mubr.bf16.gmra.mrb[0].mxu0 %v658
        %v697 = vpop.f32.mrb[0].mxu0
        %v698 = vadd.f32 0.0, %v697
        %v699 = vpop.f32.mrb[0].mxu0
        %v700 = vpop.f32.mrb[0].mxu0
        %v701 = vadd.f32 0.0, %v700
        %v702 = vpop.f32.mrb[0].mxu0
        %703 = vmatprep.mubr.bf16.mxu0 0
        %704 = vmatmul.mubr.bf16.gmra.mrb[0].mxu0 %v661
        %v705 = vpop.f32.mrb[0].mxu0
        %v706 = vadd.f32 0.0, %v705
        %v707 = vpop.f32.mrb[0].mxu0
        %v708 = vpop.f32.mrb[0].mxu0
        %v709 = vadd.f32 0.0, %v708
        %v710 = vpop.f32.mrb[0].mxu0
        %711 = vdwg.mxu0
        %v712 = vadd.f32 %v614, %v698
        %v713 = vadd.f32 %v615, %v701
        %v714 = vadd.f32 %v616, %v706
        %v715 = vadd.f32 %v617, %v709
        %716 = vst [vmem:[#allocation2] sm:$0xff] %v712
        %717 = vst [vmem:[#allocation2 + $0x8] sm:$0xff] %v713
        %718 = vst [vmem:[#allocation2 + $0x10] sm:$0xff] %v714
        %719 = vst [vmem:[#allocation2 + $0x18] sm:$0xff] %v715
      $region48: #{special_patch_embed.1} parent=39 // pred_fallthru
        _
      %v720 = vld [vmem:[#allocation2] sm:$0xff]
      %v721 = vld [vmem:[#allocation2 + $0x8] sm:$0xff]
      %v722 = vld [vmem:[#allocation2 + $0x10] sm:$0xff]
      %v723 = vld [vmem:[#allocation2 + $0x18] sm:$0xff]
      %v724 = vld [vmem:[%s4] sm:$0x1]
      %v726 = vlaneseq
      %v727 = vshrl.u32 %v726, 7
      %v728 = vsub.s32 0, %v727
      %v729 = vrot.slane %v724, %v728
      %v731 = vadd.f32 %v720, %v729
      %v732 = vadd.f32 %v721, %v729
      %v733 = vadd.f32 %v722, %v729
      %v734 = vadd.f32 %v723, %v729
      %735 = vadd.xlane.f32.xlu0 %v731
      %v736 = vpop.xlane.xlu0 %735
      %737 = vadd.xlane.f32.xlu0 %v732
      %v738 = vpop.xlane.xlu0 %737
      %739 = vadd.xlane.f32.xlu0 %v733
      %v740 = vpop.xlane.xlu0 %739
      %741 = vadd.xlane.f32.xlu0 %v734
      %v742 = vpop.xlane.xlu0 %741
      %v743 = vrcp.pop 128.0
      %v744 = vmul.f32 %v736, %v743
      %v745 = vmul.f32 %v738, %v743
      %v746 = vmul.f32 %v740, %v743
      %v747 = vmul.f32 %v742, %v743
      %v748 = vmul.f32 %v731, %v731
      %v749 = vmul.f32 %v732, %v732
      %v750 = vmul.f32 %v733, %v733
      %v751 = vmul.f32 %v734, %v734
      %752 = vadd.xlane.f32.xlu0 %v748
      %v753 = vpop.xlane.xlu0 %752
      %754 = vadd.xlane.f32.xlu0 %v749
      %v755 = vpop.xlane.xlu0 %754
      %756 = vadd.xlane.f32.xlu0 %v750
      %v757 = vpop.xlane.xlu0 %756
      %758 = vadd.xlane.f32.xlu0 %v751
      %v759 = vpop.xlane.xlu0 %758
      %v760 = vmul.f32 %v753, %v743
      %v761 = vmul.f32 %v755, %v743
      %v762 = vmul.f32 %v757, %v743
      %v763 = vmul.f32 %v759, %v743
      %v764 = vmul.f32 %v744, %v744
      %v765 = vmul.f32 %v745, %v745
      %v766 = vmul.f32 %v746, %v746
      %v767 = vmul.f32 %v747, %v747
      %v768 = vsub.f32 %v760, %v764
      %v769 = vsub.f32 %v761, %v765
      %v770 = vsub.f32 %v762, %v766
      %v771 = vsub.f32 %v763, %v767
      %v772 = vadd.f32 %v768, 1e-05
      %v773 = vadd.f32 %v769, 1e-05
      %v774 = vadd.f32 %v770, 1e-05
      %v775 = vadd.f32 %v771, 1e-05
      %v776 = vrsqrt.pop %v772
      %v777 = vrsqrt.pop %v773
      %v778 = vrsqrt.pop %v774
      %v779 = vrsqrt.pop %v775
      %v780 = vsub.f32 %v731, %v744
      %v781 = vsub.f32 %v732, %v745
      %v782 = vsub.f32 %v733, %v746
      %v783 = vsub.f32 %v734, %v747
      %v784 = vmul.f32 %v780, %v776
      %v785 = vmul.f32 %v781, %v777
      %v786 = vmul.f32 %v782, %v778
      %v787 = vmul.f32 %v783, %v779
      %s788 = scalar_lea.vmem %s4, 1
      %v789 = vld [vmem:[%s788] sm:$0x1]
      %v791 = vlaneseq
      %v792 = vshrl.u32 %v791, 7
      %v793 = vsub.s32 0, %v792
      %v794 = vrot.slane %v789, %v793
      %v796 = vmul.f32 %v784, %v794
      %v797 = vmul.f32 %v785, %v794
      %v798 = vmul.f32 %v786, %v794
      %v799 = vmul.f32 %v787, %v794
      %s800 = scalar_lea.vmem %s4, 2
      %v801 = vld [vmem:[%s800] sm:$0x1]
      %v803 = vlaneseq
      %v804 = vshrl.u32 %v803, 7
      %v805 = vsub.s32 0, %v804
      %v806 = vrot.slane %v801, %v805
      %v808 = vadd.f32 %v796, %v806
      %v809 = vadd.f32 %v797, %v806
      %v810 = vadd.f32 %v798, %v806
      %v811 = vadd.f32 %v799, %v806
      %812 = vst [vmem:[%s397] sm:$0xff] %v808
      %813 = vst [vmem:[%s397 + $0x8] sm:$0xff] %v809
      %814 = vst [vmem:[%s397 + $0x10] sm:$0xff] %v810
      %815 = vst [vmem:[%s397 + $0x18] sm:$0xff] %v811
      %s816 = smul.u32 4, %s20
      %p817 = scmp.lt.s32.totalorder %s21, 3
      %s818 = scalar_select %p817, %s21, 3
      %p819 = scmp.lt.s32.totalorder %s816, 3
      %s820 = scalar_select %p819, %s816, 3
      %s821 = smul.addr %s818, 4
      %s822 = sadd.s32 %s820, %s821
      %s823 = smul.addr %s822, 8
      %s824 = scalar_lea.vmem %s5, %s823
      // Predicated region
      $region49: #{special_patch_embed.1} parent=39 // pred_check
        %p825 = pneg %p192
      $region50: #{special_patch_embed.1} parent=39 // pred_check_branch
        %827 = sbr.rel (%p825) target = $region52
      $region51: #{special_patch_embed.1} parent=39 // pred_region
        %s828 = smul.u32 4, %s20
      $region52: #{special_patch_embed.1} parent=39 // pred_fallthru
        _
    $region40: #{special_patch_embed.1} parent=5 // pred_fallthru
      _
    %p829 = scmp.le.s32.totalorder 2, %s11
    // Predicated region
    $region53: #{special_patch_embed.1} parent=5 // pred_check
      %p830 = pneg %p829
    $region54: #{special_patch_embed.1} parent=5 // pred_check_branch
      %832 = sbr.rel (%p830) target = $region56
    $region55: #{special_patch_embed.1} parent=5 // pred_region
      %s833 = ssub.s32 %s11, 2
      // Predicated region
      $region57: #{special_patch_embed.1} parent=55 // pred_check
        %p834 = pneg %p198
      $region58: #{special_patch_embed.1} parent=55 // pred_check_branch
        %836 = sbr.rel (%p834) target = $region60
      $region59: #{special_patch_embed.1} parent=55 // pred_region
        %s837 = smul.u32 4, %s22
        %p838 = scmp.lt.s32.totalorder %s23, 3
        %s839 = scalar_select %p838, %s23, 3
        %p840 = scmp.lt.s32.totalorder %s837, 3
        %s841 = scalar_select %p840, %s837, 3
        %s842 = smul.addr %s839, 4
        %s843 = sadd.s32 %s841, %s842
        %s844 = smul.addr %s843, 8
        %s845 = scalar_lea.vmem %s5, %s844
      $region60: #{special_patch_embed.1} parent=55 // pred_fallthru
        _
    $region56: #{special_patch_embed.1} parent=5 // pred_fallthru
      _
  $region6: #{special_patch_embed.1} parent=0 // loop_footer
    %s15 = sadd.s32 1, %s11
  $region7: #{special_patch_embed.1} parent=0 // loop_footer_branch
    %10 = sbr.rel target = $region3
  $region8: #{special_patch_embed.1} parent=0 // loop_exit
    _

</llo_original>
